<compile_context>
chip_gen: v7x
topology: tpu7x:2x2x1
jax: 0.10.0
libtpu: 0.0.40
codegen_flags: <defaults>
</compile_context>

<pallas_src>
import jax
import jax.numpy as jnp
from jax.experimental import pallas as pl
from jax.experimental.pallas import tpu as pltpu

BN_EPS = 1e-5
LANE = 128
SUBLANE = 8


def _round_up(a, b):
    return (a + b - 1) // b * b


def _stats_kernel(x_ref, w1_ref, part_ref):
    # h = x @ W1   (b1 omitted: exactly cancelled by BN mean subtraction)
    h = jnp.dot(x_ref[...], w1_ref[...], preferred_element_type=jnp.float32)
    s = jnp.sum(h, axis=0, keepdims=True)        # (1, H_pad)
    sq = jnp.sum(h * h, axis=0, keepdims=True)   # (1, H_pad)
    part_ref[0] = jnp.concatenate([s, sq], axis=0)   # (2, H_pad) partials


def _apply_kernel(x_ref, w1_ref, scale_ref, shift_ref, w2_ref, b2_ref, o_ref):
    x = x_ref[...]                                                   # (T, F_pad)
    h = jnp.dot(x, w1_ref[...], preferred_element_type=jnp.float32)  # (T, H_pad)
    h = h * scale_ref[...] + shift_ref[...]      # folded BN affine (b1 cancelled)
    h = jnp.maximum(h, 0.0)                      # ReLU
    y = jnp.dot(h, w2_ref[...], preferred_element_type=jnp.float32) + b2_ref[...]
    g = 0.5 * (jnp.tanh(0.5 * y) + 1.0)          # sigmoid via single tanh
    o_ref[...] = (g * x).astype(o_ref.dtype)     # gate the residual input


def attention_module(x, w1, b1, gamma, beta, w2, b2, *, tile_n=None):
    """x: (N, F_in); w1: (F_in, H); w2: (H, F_out); F_out == F_in (residual)."""
    N, F_in = x.shape
    H = w1.shape[1]
    F_out = w2.shape[1]
    assert F_out == F_in, "residual multiply requires out_features == in_features"

    # b1 is exactly cancelled by training-mode BatchNorm's mean subtraction.
    del b1

    if tile_n is None:
        tile_n = min(512, _round_up(N, SUBLANE))
    tile_n = max(SUBLANE, _round_up(tile_n, SUBLANE))
    n_pad = _round_up(N, tile_n)
    num_tiles = n_pad // tile_n

    f_pad = _round_up(F_in, LANE)
    h_pad = _round_up(H, LANE)

    f32 = jnp.float32
    # Zero-pad to lane-dense shapes (padded rows/cols are exact no-ops).
    xp = jnp.pad(x.astype(f32), ((0, n_pad - N), (0, f_pad - F_in)))
    w1p = jnp.pad(w1.astype(f32), ((0, f_pad - F_in), (0, h_pad - H)))
    w2p = jnp.pad(w2.astype(f32), ((0, h_pad - H), (0, f_pad - F_out)))
    gp = jnp.pad(gamma.astype(f32), (0, h_pad - H)).reshape(1, h_pad)
    bp = jnp.pad(beta.astype(f32), (0, h_pad - H)).reshape(1, h_pad)
    b2p = jnp.pad(b2.astype(f32), (0, f_pad - F_out)).reshape(1, f_pad)

    cparams = pltpu.CompilerParams(
        dimension_semantics=("parallel",),       # shard row tiles across TCs (v7x)
        vmem_limit_bytes=32 * 1024 * 1024,       # tiles sized well under this
    )

    # ---------- pass 1: per-tile partial sums of h and h^2 ----------
    stats_cost = pl.CostEstimate(
        flops=2 * n_pad * f_pad * h_pad + 3 * n_pad * h_pad,
        transcendentals=0,
        bytes_accessed=4 * (n_pad * f_pad + f_pad * h_pad + num_tiles * 2 * h_pad),
    )
    partials = pl.pallas_call(
        _stats_kernel,
        out_shape=jax.ShapeDtypeStruct((num_tiles, 2, h_pad), f32),
        grid=(num_tiles,),
        in_specs=[
            pl.BlockSpec((tile_n, f_pad), lambda i: (i, 0)),   # x tile
            pl.BlockSpec((f_pad, h_pad), lambda i: (0, 0)),    # W1 (resident)
        ],
        out_specs=pl.BlockSpec((1, 2, h_pad), lambda i: (i, 0, 0)),
        compiler_params=cparams,
        cost_estimate=stats_cost,
    )(xp, w1p)

    # Tiny (H,)-sized finish: full-batch stats, fold BN into scale/shift rows.
    sums = jnp.sum(partials, axis=0)                    # (2, h_pad)
    mean = sums[0] / N                                  # true N; zero-pad rows add 0
    var = jnp.maximum(sums[1] / N - mean * mean, 0.0)   # biased (training-mode) var
    inv_std = jax.lax.rsqrt(var + BN_EPS)
    scale = gp * inv_std                                # (1, h_pad)
    shift = bp - mean * scale                           # (1, h_pad)

    # ---------- pass 2: normalize + ReLU + linear2 + sigmoid gate ----------
    apply_cost = pl.CostEstimate(
        flops=4 * n_pad * f_pad * h_pad + 6 * n_pad * h_pad + 4 * n_pad * f_pad,
        transcendentals=n_pad * f_pad,
        bytes_accessed=4 * (2 * n_pad * f_pad + 2 * f_pad * h_pad
                            + 2 * h_pad + f_pad),
    )
    out_pad = pl.pallas_call(
        _apply_kernel,
        out_shape=jax.ShapeDtypeStruct((n_pad, f_pad), x.dtype),
        grid=(num_tiles,),
        in_specs=[
            pl.BlockSpec((tile_n, f_pad), lambda i: (i, 0)),   # x tile
            pl.BlockSpec((f_pad, h_pad), lambda i: (0, 0)),    # W1
            pl.BlockSpec((1, h_pad), lambda i: (0, 0)),        # BN scale
            pl.BlockSpec((1, h_pad), lambda i: (0, 0)),        # BN shift
            pl.BlockSpec((h_pad, f_pad), lambda i: (0, 0)),    # W2
            pl.BlockSpec((1, f_pad), lambda i: (0, 0)),        # b2
        ],
        out_specs=pl.BlockSpec((tile_n, f_pad), lambda i: (i, 0)),
        compiler_params=cparams,
        cost_estimate=apply_cost,
    )(xp, w1p, scale, shift, w2p, b2p)

    return out_pad[:N, :F_out]


def reference(x, w1, b1, gamma, beta, w2, b2):
    h = x @ w1 + b1
    mean = h.mean(axis=0, keepdims=True)
    var = ((h - mean) ** 2).mean(axis=0, keepdims=True)
    h = (h - mean) / jnp.sqrt(var + BN_EPS) * gamma + beta
    h = jnp.maximum(h, 0.0)
    y = jax.nn.sigmoid(h @ w2 + b2)
    return y * x


if __name__ == "__main__":
    # Shapes consistent with the module: Linear(16 -> 32) -> BN -> ReLU -> Linear(32 -> 16)
    N, F_IN, HID, F_OUT = 8, 16, 32, 16

    key = jax.random.PRNGKey(0)
    kx, kw1, kb1, kw2, kb2, kg, kb = jax.random.split(key, 7)

    x = jax.random.normal(kx, (N, F_IN), dtype=jnp.float32)
    w1 = jax.random.uniform(kw1, (F_IN, HID), jnp.float32, -1.0, 1.0) / jnp.sqrt(F_IN)
    b1 = jax.random.uniform(kb1, (HID,), jnp.float32, -1.0, 1.0) / jnp.sqrt(F_IN)
    gamma = 1.0 + 0.1 * jax.random.normal(kg, (HID,), jnp.float32)
    beta = 0.1 * jax.random.normal(kb, (HID,), jnp.float32)
    w2 = jax.random.uniform(kw2, (HID, F_OUT), jnp.float32, -1.0, 1.0) / jnp.sqrt(HID)
    b2 = jax.random.uniform(kb2, (F_OUT,), jnp.float32, -1.0, 1.0) / jnp.sqrt(HID)

    out = jax.block_until_ready(attention_module(x, w1, b1, gamma, beta, w2, b2))
    ref = reference(x, w1, b1, gamma, beta, w2, b2)
    assert out.shape == (N, F_OUT)
    assert jnp.allclose(out, ref, atol=3e-5, rtol=3e-5), "mismatch vs reference"

    # Multi-tile + ragged-N path: 28 rows, forced 8-row tiles -> 4 grid steps,
    # checks that BN statistics stay full-batch across tiles and zero-row padding.
    x2 = jax.random.normal(jax.random.PRNGKey(1), (28, F_IN), dtype=jnp.float32)
    out2 = jax.block_until_ready(
        attention_module(x2, w1, b1, gamma, beta, w2, b2, tile_n=8))
    ref2 = reference(x2, w1, b1, gamma, beta, w2, b2)
    assert jnp.allclose(out2, ref2, atol=3e-5, rtol=3e-5), "multi-tile mismatch"

    print("KERNEL_OK")
</pallas_src>

<mosaic_0001>
module attributes {stable_mosaic.version = 11 : i64} {
  func.func @_stats_kernel(%arg0: i32, %arg1: memref<8x128xf32, #tpu.memory_space<vmem>>, %arg2: memref<128x128xf32, #tpu.memory_space<vmem>>, %arg3: memref<1x2x128xf32, #tpu.memory_space<vmem>>) attributes {dimension_semantics = [#tpu.dimension_semantics<parallel>], iteration_bounds = array<i64: 1>, scalar_prefetch = 0 : i64, scratch_operands = 0 : i64, tpu.core_type = #tpu.core_type<tc>, window_params = [{transform_indices = @transform_0, window_bounds = array<i64: 8, 128>}, {pipeline_mode = #tpu.pipeline_mode<synchronous>, transform_indices = @transform_1, window_bounds = array<i64: 128, 128>}, {transform_indices = @transform_2, window_bounds = array<i64: 1, 2, 128>}]} {
    %c0 = arith.constant 0 : index
    %c0_0 = arith.constant 0 : index
    %0 = vector.load %arg1[%c0, %c0_0] : memref<8x128xf32, #tpu.memory_space<vmem>>, vector<8x128xf32>
    %c0_1 = arith.constant 0 : index
    %c0_2 = arith.constant 0 : index
    %1 = vector.load %arg2[%c0_1, %c0_2] : memref<128x128xf32, #tpu.memory_space<vmem>>, vector<128x128xf32>
    %cst = arith.constant dense<0.000000e+00> : vector<8x128xf32>
    %2 = tpu.matmul %0, %1, %cst {dimension_numbers = #tpu.dot_dimension_numbers<[1], [0], [0], [1], [0, 0, 1, 1], [], []>} : vector<8x128xf32>, vector<128x128xf32>, vector<8x128xf32> -> vector<8x128xf32>
    %cst_3 = arith.constant dense<0.000000e+00> : vector<128xf32>
    %3 = vector.multi_reduction <add>, %2, %cst_3 [0] : vector<8x128xf32> to vector<128xf32>
    %4 = vector.shape_cast %3 : vector<128xf32> to vector<1x128xf32>
    %5 = arith.mulf %2, %2 : vector<8x128xf32>
    %cst_4 = arith.constant dense<0.000000e+00> : vector<128xf32>
    %6 = vector.multi_reduction <add>, %5, %cst_4 [0] : vector<8x128xf32> to vector<128xf32>
    %7 = vector.shape_cast %6 : vector<128xf32> to vector<1x128xf32>
    %8 = tpu.concatenate %4, %7 in 0 : vector<1x128xf32>, vector<1x128xf32> -> vector<2x128xf32>
    %c0_5 = arith.constant 0 : index
    %c0_6 = arith.constant 0 : index
    %c0_7 = arith.constant 0 : index
    %9 = vector.load %arg3[%c0_5, %c0_6, %c0_7] : memref<1x2x128xf32, #tpu.memory_space<vmem>>, vector<1x2x128xf32>
    %10 = vector.shape_cast %9 : vector<1x2x128xf32> to vector<2x128xf32>
    %11 = vector.shape_cast %8 : vector<2x128xf32> to vector<1x2x128xf32>
    tpu.vector_store %arg3[%c0_5, %c0_6, %c0_7], %11 {strides = array<i32>} : memref<1x2x128xf32, #tpu.memory_space<vmem>>, vector<1x2x128xf32>,
    return
  }
  func.func @transform_0(%arg0: i32) -> (i32, i32) {
    %c0_i32 = arith.constant 0 : i32
    %c0_i32_0 = arith.constant 0 : i32
    return %arg0, %c0_i32 : i32, i32
  }
  func.func @transform_1(%arg0: i32) -> (i32, i32) {
    %c0_i32 = arith.constant 0 : i32
    %c0_i32_0 = arith.constant 0 : i32
    %c0_i32_1 = arith.constant 0 : i32
    return %c0_i32, %c0_i32_0 : i32, i32
  }
  func.func @transform_2(%arg0: i32) -> (i32, i32, i32) {
    %c0_i32 = arith.constant 0 : i32
    %c0_i32_0 = arith.constant 0 : i32
    %c0_i32_1 = arith.constant 0 : i32
    return %arg0, %c0_i32, %c0_i32_0 : i32, i32, i32
  }
}

</mosaic_0001>

<llo_original>
// kernel: tpu_custom_call.1
$region0: #{tpu_custom_call.1}
  #allocation0 [shape = 'u32[]', space=smem, size = 0x4, offset = 0x4, fixed_abs, tag = 'smem constant byte address 0x4 - core index']
  #allocation1 [shape = 'u32[144,128]{1,0:T(1,128)}', space=vmem, size = 0x12000, scoped, tag = 'internal scratch']
  %s0 = inlined_call_operand.hbm [shape: f32[8,128], index: 0, kind: input, shape index: {}]
  %s1 = inlined_call_operand.hbm [shape: f32[128,128], index: 1, kind: input, shape index: {}]
  %s2 = inlined_call_operand.hbm [shape: f32[1,2,128], index: 2, kind: output, shape index: {}]
  %s3 = sld [smem:[#allocation0]]
  $region26: #{tpu_custom_call.1} parent=0
    _
  %s5 = ssub.s32 1, %s3
  %s6 = scalar_select 0, %s5, %s3
  $region1: #{tpu_custom_call.1} parent=0
    #allocation2 [shape = 'u8[4096]{0}', space=vmem, size = 0x1000, scoped, tag = 'input window, operand 0, single buffered']
    #allocation3 [shape = 's32[1]{0}', space=sflag, size = 0x4, scoped, tag = 'scoped memory for tpu_custom_call.1']
    #allocation4 [shape = 's32[1]{0}', space=sflag, size = 0x4, scoped, tag = 'scoped memory for tpu_custom_call.1']
    #allocation5 [shape = 'u8[65536]{0}', space=vmem, size = 0x10000, scoped, tag = 'input window, operand 1, single buffered']
    #allocation6 [shape = 's32[1]{0}', space=sflag, size = 0x4, scoped, tag = 'scoped memory for tpu_custom_call.1']
    #allocation7 [shape = 'u8[1024]{0}', space=vmem, size = 0x400, scoped, tag = 'output window, operand 0, single buffered']
    %7 = vsyncpa [#allocation3], 0
    %8 = vsyncpa [#allocation6], 0
    %9 = vsyncpa [#allocation4], 0
    // Predicated region
    $region2: #{tpu_custom_call.1} parent=1 // pred_check
      _
    $region3: #{tpu_custom_call.1} parent=1 // pred_check_branch
      %11 = sbr.rel (0) target = $region5
    $region4: #{tpu_custom_call.1} parent=1 // pred_region
      %s13 = ssub.s32 128, 128
      %14 = vsyncadd [#allocation3], %s13
      %s16 = sshll.u32 [#allocation2], 4
      %s17 = int_to_ptr.vmem [resolvable:$true] %s16
      %19 = dma.hbm_to_vmem [thread:$0]  %s0, 128, %s17, [#allocation3]
    $region5: #{tpu_custom_call.1} parent=1 // pred_fallthru
      _
    // Predicated region
    $region6: #{tpu_custom_call.1} parent=1 // pred_check
      _
    $region7: #{tpu_custom_call.1} parent=1 // pred_check_branch
      %21 = sbr.rel (0) target = $region9
    $region8: #{tpu_custom_call.1} parent=1 // pred_region
      %s23 = ssub.s32 2048, 2048
      %24 = vsyncadd [#allocation6], %s23
      %s25 = sshll.u32 [#allocation5], 4
      %s26 = int_to_ptr.vmem [resolvable:$true] %s25
      %31 = dma.hbm_to_vmem [thread:$0]  %s1, 2048, %s26, [#allocation6], 128, 128, 8
    $region9: #{tpu_custom_call.1} parent=1 // pred_fallthru
      _
    // Predicated region
    $region10: #{tpu_custom_call.1} parent=1 // pred_check
      _
    $region11: #{tpu_custom_call.1} parent=1 // pred_check_branch
      %33 = sbr.rel (0) target = $region13
    $region12: #{tpu_custom_call.1} parent=1 // pred_region
      %34 = dma.done [#allocation3], 128
    $region13: #{tpu_custom_call.1} parent=1 // pred_fallthru
      _
    // Predicated region
    $region14: #{tpu_custom_call.1} parent=1 // pred_check
      _
    $region15: #{tpu_custom_call.1} parent=1 // pred_check_branch
      %36 = sbr.rel (0) target = $region17
    $region16: #{tpu_custom_call.1} parent=1 // pred_region
      %37 = dma.done [#allocation6], 2048
    $region17: #{tpu_custom_call.1} parent=1 // pred_fallthru
      _
    %v38 = vld [vmem:[#allocation2] sm:$0xff]
    %v39 = vld [vmem:[#allocation5] sm:$0xff]
    %v40 = vld [vmem:[#allocation5 + $0x8] sm:$0xff]
    %v41 = vld [vmem:[#allocation5 + $0x10] sm:$0xff]
    %v42 = vld [vmem:[#allocation5 + $0x18] sm:$0xff]
    %v43 = vld [vmem:[#allocation5 + $0x20] sm:$0xff]
    %v44 = vld [vmem:[#allocation5 + $0x28] sm:$0xff]
    %v45 = vld [vmem:[#allocation5 + $0x30] sm:$0xff]
    %v46 = vld [vmem:[#allocation5 + $0x38] sm:$0xff]
    %v47 = vld [vmem:[#allocation5 + $0x40] sm:$0xff]
    %v48 = vld [vmem:[#allocation5 + $0x48] sm:$0xff]
    %v49 = vld [vmem:[#allocation5 + $0x50] sm:$0xff]
    %v50 = vld [vmem:[#allocation5 + $0x58] sm:$0xff]
    %v51 = vld [vmem:[#allocation5 + $0x60] sm:$0xff]
    %v52 = vld [vmem:[#allocation5 + $0x68] sm:$0xff]
    %v53 = vld [vmem:[#allocation5 + $0x70] sm:$0xff]
    %v54 = vld [vmem:[#allocation5 + $0x78] sm:$0xff]
    %55 = vmatprep.subr.mxu0 0.0
    %56 = vmatpush1.msra.mxu0 %v39
    %57 = vmatprep.subr.mxu0 0.0
    %58 = vmatpush1.msra.mxu0 %v40
    %59 = vmatprep.subr.mxu0 0.0
    %60 = vmatpush1.msra.mxu0 %v41
    %61 = vmatprep.subr.mxu0 0.0
    %62 = vmatpush1.msra.mxu0 %v42
    %63 = vmatprep.subr.mxu0 0.0
    %64 = vmatpush1.msra.mxu0 %v43
    %65 = vmatprep.subr.mxu0 0.0
    %66 = vmatpush1.msra.mxu0 %v44
    %67 = vmatprep.subr.mxu0 0.0
    %68 = vmatpush1.msra.mxu0 %v45
    %69 = vmatprep.subr.mxu0 0.0
    %70 = vmatpush1.msra.mxu0 %v46
    %71 = vmatprep.subr.mxu0 0.0
    %72 = vmatpush1.msra.mxu0 %v47
    %73 = vmatprep.subr.mxu0 0.0
    %74 = vmatpush1.msra.mxu0 %v48
    %75 = vmatprep.subr.mxu0 0.0
    %76 = vmatpush1.msra.mxu0 %v49
    %77 = vmatprep.subr.mxu0 0.0
    %78 = vmatpush1.msra.mxu0 %v50
    %79 = vmatprep.subr.mxu0 0.0
    %80 = vmatpush1.msra.mxu0 %v51
    %81 = vmatprep.subr.mxu0 0.0
    %82 = vmatpush1.msra.mxu0 %v52
    %83 = vmatprep.subr.mxu0 0.0
    %84 = vmatpush1.msra.mxu0 %v53
    %85 = vmatprep.subr.mxu0 0.0
    %86 = vmatpush1.msra.mxu0 %v54
    %87 = vmatprep.subr.mxu0 0.0
    %88 = vmatpush1.msra.mxu0 0.0
    %89 = vmatprep.subr.mxu0 0.0
    %90 = vmatpush1.msra.mxu0 0.0
    %91 = vmatprep.subr.mxu0 0.0
    %92 = vmatpush1.msra.mxu0 0.0
    %93 = vmatprep.subr.mxu0 0.0
    %94 = vmatpush1.msra.mxu0 0.0
    %95 = vmatprep.subr.mxu0 0.0
    %96 = vmatpush1.msra.mxu0 0.0
    %97 = vmatprep.subr.mxu0 0.0
    %98 = vmatpush1.msra.mxu0 0.0
    %99 = vmatprep.subr.mxu0 0.0
    %100 = vmatpush1.msra.mxu0 0.0
    %101 = vmatprep.subr.mxu0 0.0
    %102 = vmatpush1.msra.mxu0 0.0
    %103 = vmatprep.subr.mxu0 0.0
    %104 = vmatpush1.msra.mxu0 0.0
    %105 = vmatprep.subr.mxu0 0.0
    %106 = vmatpush1.msra.mxu0 0.0
    %107 = vmatprep.subr.mxu0 0.0
    %108 = vmatpush1.msra.mxu0 0.0
    %109 = vmatprep.subr.mxu0 0.0
    %110 = vmatpush1.msra.mxu0 0.0
    %111 = vmatprep.subr.mxu0 0.0
    %112 = vmatpush1.msra.mxu0 0.0
    %113 = vmatprep.subr.mxu0 0.0
    %114 = vmatpush1.msra.mxu0 0.0
    %115 = vmatprep.subr.mxu0 0.0
    %116 = vmatpush1.msra.mxu0 0.0
    %117 = vmatprep.subr.mxu0 0.0
    %118 = vmatpush1.msra.mxu0 0.0
    %119 = vmatprep.mubr.f32.mxu0 0.0
    %120 = vmatmul.mubr.f32.gmra.mrb[0].mxu0 %v38
    %v121 = vpop.f32.mrb[0].mxu0
    %v122 = vadd.f32 0.0, %v121
    %v123 = vpop.f32.mrb[0].mxu0
    %124 = vdwg.mxu0
    %v125 = vrot.slane %v122, 4
    %v126 = vadd.f32 %v122, %v125
    %v127 = vrot.slane %v126, 2
    %v128 = vadd.f32 %v126, %v127
    %v129 = vrot.slane %v128, 1
    %v130 = vadd.f32 %v128, %v129
    %v131 = vmul.f32 %v122, %v122
    %v132 = vrot.slane %v131, 4
    %v133 = vadd.f32 %v131, %v132
    %v134 = vrot.slane %v133, 2
    %v135 = vadd.f32 %v133, %v134
    %v136 = vrot.slane %v135, 1
    %v137 = vadd.f32 %v135, %v136
    %vm138 = vcmask 1040384
    %v139 = vsel %vm138, %v130, %v137
    %140 = vst [vmem:[#allocation7] sm:$0x3] %v139
    // Predicated region
    $region18: #{tpu_custom_call.1} parent=1 // pred_check
      _
    $region19: #{tpu_custom_call.1} parent=1 // pred_check_branch
      %142 = sbr.rel (0) target = $region21
    $region20: #{tpu_custom_call.1} parent=1 // pred_region
      %s144 = ssub.s32 32, 32
      %145 = vsyncadd [#allocation4], %s144
      %s147 = sshll.u32 [#allocation7], 4
      %s148 = int_to_ptr.vmem [resolvable:$true] %s147
      %150 = dma.vmem_to_hbm [thread:$0]  %s148, 32, %s2, [#allocation4]
    $region21: #{tpu_custom_call.1} parent=1 // pred_fallthru
      _
    // Predicated region
    $region22: #{tpu_custom_call.1} parent=1 // pred_check
      _
    $region23: #{tpu_custom_call.1} parent=1 // pred_check_branch
      %152 = sbr.rel (0) target = $region25
    $region24: #{tpu_custom_call.1} parent=1 // pred_region
      %153 = dma.done [#allocation4], 32
    $region25: #{tpu_custom_call.1} parent=1 // pred_fallthru
      _
    %154 = vsyncpa [#allocation3], 1
    %155 = vsyncpa [#allocation6], 1
    %156 = vsyncpa [#allocation4], 1

</llo_original>
